<compile_context>
chip_gen: v5e
topology: v5e:2x2
jax: 0.10.0
libtpu: 0.0.40
codegen_flags: <defaults>
</compile_context>

<pallas_src>
import functools

import jax
import jax.numpy as jnp
from jax import lax
from jax.experimental import pallas as pl
from jax.experimental.pallas import tpu as pltpu


def _dense_layer_kernel(x_ref, w_ref, b_ref, o_ref, xpad_ref, patch_ref,
                        *, H, W):
    """One batch element per grid step.

    x_ref:     (Cin, H*W)         flattened NCHW input (lane-dense)
    w_ref:     (Cout, 9*Cin)      conv weights, tap-major / channel-minor
    b_ref:     (Cout, 1)          bias
    o_ref:     (Cin+Cout, H*W)    [x ; relu(conv3x3(x)+b)]  (lane-dense)
    xpad_ref:  (Cin, (H+2)*W+2)   VMEM scratch: row-halo padded, flattened x
    patch_ref: (9*Cin, H*W)       VMEM scratch: im2col patches
    """
    Cin, HW = x_ref.shape
    Cout = w_ref.shape[0]

    xv = x_ref[...]                                    # (Cin, HW)

    # channel concat, first half: copy x straight through (fused, no wrapper
    # concatenate / extra HBM pass).
    o_ref[0:Cin, :] = xv

    # In-kernel zero padding: one halo row above/below plus one spare element
    # on each end so every tap below is a plain contiguous lane slice.
    xpad_ref[...] = jnp.zeros_like(xpad_ref)
    xpad_ref[:, W + 1:W + 1 + HW] = xv

    # im2col: tap (dy, dx) of output pixel p = y*W + x lives at
    #   xpad[:, (W+1) + dy*W + dx + p]
    # horizontal out-of-range taps are zeroed with a column mask; vertical
    # out-of-range taps land in the zero halo rows.
    col = lax.broadcasted_iota(jnp.int32, (1, HW), 1) % W
    for dy in (-1, 0, 1):
        for dx in (-1, 0, 1):
            t = (dy + 1) * 3 + (dx + 1)
            base = (W + 1) + dy * W + dx
            tap = xpad_ref[:, base:base + HW]          # (Cin, HW)
            if dx == -1:
                tap = jnp.where(col >= 1, tap, 0.0)
            elif dx == 1:
                tap = jnp.where(col <= W - 2, tap, 0.0)
            patch_ref[t * Cin:(t + 1) * Cin, :] = tap

    # single MXU matmul: (Cout, 9*Cin) @ (9*Cin, HW) -> (Cout, HW), lane-dense
    acc = jnp.dot(w_ref[...], patch_ref[...],
                  preferred_element_type=jnp.float32)
    acc = jnp.maximum(acc + b_ref[...], 0.0)           # bias + ReLU
    o_ref[Cin:Cin + Cout, :] = acc.astype(o_ref.dtype)


def dense_layer_forward(x_nchw, w_oihw, bias):
    """x: (N, Cin, H, W), w: (Cout, Cin, 3, 3) (PyTorch OIHW), bias: (Cout,).

    Returns (N, Cin + Cout, H, W) = cat((x, relu(conv3x3(x))), dim=1).
    """
    N, Cin, H, W = x_nchw.shape
    Cout = w_oihw.shape[0]
    HW = H * W

    x_flat = x_nchw.reshape(N, Cin, HW)                       # free view
    w2d = jnp.transpose(w_oihw, (0, 2, 3, 1)).reshape(Cout, 9 * Cin)  # tiny
    b2d = bias.reshape(Cout, 1)

    kernel = functools.partial(_dense_layer_kernel, H=H, W=W)

    out_flat = pl.pallas_call(
        kernel,
        out_shape=jax.ShapeDtypeStruct((N, Cin + Cout, HW), x_nchw.dtype),
        grid=(N,),
        in_specs=[
            pl.BlockSpec((None, Cin, HW), lambda n: (n, 0, 0)),
            pl.BlockSpec((Cout, 9 * Cin), lambda n: (0, 0)),
            pl.BlockSpec((Cout, 1), lambda n: (0, 0)),
        ],
        out_specs=pl.BlockSpec((None, Cin + Cout, HW), lambda n: (n, 0, 0)),
        scratch_shapes=[
            pltpu.VMEM((Cin, (H + 2) * W + 2), jnp.float32),
            pltpu.VMEM((9 * Cin, HW), jnp.float32),
        ],
        compiler_params=pltpu.CompilerParams(
            dimension_semantics=("parallel",),
            vmem_limit_bytes=32 * 1024 * 1024),
    )(x_flat, w2d, b2d)

    return out_flat.reshape(N, Cin + Cout, H, W)


def reference_forward(x_nchw, w_oihw, bias):
    """Pure-JAX reference (lax conv) for correctness checking."""
    y = lax.conv_general_dilated(
        x_nchw, w_oihw, window_strides=(1, 1), padding=((1, 1), (1, 1)),
        dimension_numbers=("NCHW", "OIHW", "NCHW"))
    y = jnp.maximum(y + bias.reshape(1, -1, 1, 1), 0.0)
    return jnp.concatenate([x_nchw, y], axis=1)


if __name__ == "__main__":
    # dense_layer(in_channels=4, growthRate=8), activation='relu'
    N, Cin, H, W = 2, 4, 16, 16
    Cout = 8  # growthRate

    key = jax.random.PRNGKey(0)
    kx, kw, kb = jax.random.split(key, 3)

    x = jax.random.normal(kx, (N, Cin, H, W), dtype=jnp.float32)
    # Deterministic parameter init (kaiming-uniform-like scale for a 3x3 conv).
    fan_in = Cin * 3 * 3
    bound = 1.0 / (fan_in ** 0.5)
    w = jax.random.uniform(kw, (Cout, Cin, 3, 3), jnp.float32, -bound, bound)
    b = jax.random.uniform(kb, (Cout,), jnp.float32, -bound, bound)

    fwd = jax.jit(dense_layer_forward)
    out = jax.block_until_ready(fwd(x, w, b))
    ref = jax.block_until_ready(reference_forward(x, w, b))

    assert out.shape == (N, Cin + Cout, H, W), out.shape
    assert jnp.allclose(out, ref, atol=1e-4, rtol=1e-4), "mismatch vs reference"
    print("KERNEL_OK")
</pallas_src>

<mosaic_0001>
module attributes {stable_mosaic.version = 11 : i64} {
  func.func @_dense_layer_kernel(%arg0: i32, %arg1: memref<1x4x256xf32, #tpu.memory_space<vmem>>, %arg2: memref<8x36xf32, #tpu.memory_space<vmem>>, %arg3: memref<8x1xf32, #tpu.memory_space<vmem>>, %arg4: memref<1x12x256xf32, #tpu.memory_space<vmem>>, %arg5: memref<4x290xf32, #tpu.memory_space<vmem>>, %arg6: memref<36x256xf32, #tpu.memory_space<vmem>>) attributes {dimension_semantics = [#tpu.dimension_semantics<parallel>], iteration_bounds = array<i64: 2>, scalar_prefetch = 0 : i64, scratch_operands = 2 : i64, tpu.core_type = #tpu.core_type<tc>, window_params = [{transform_indices = @transform_0, window_bounds = array<i64: 1, 4, 256>}, {pipeline_mode = #tpu.pipeline_mode<synchronous>, transform_indices = @transform_1, window_bounds = array<i64: 8, 36>}, {pipeline_mode = #tpu.pipeline_mode<synchronous>, transform_indices = @transform_2, window_bounds = array<i64: 8, 1>}, {transform_indices = @transform_3, window_bounds = array<i64: 1, 12, 256>}]} {
    %c0 = arith.constant 0 : index
    %c0_0 = arith.constant 0 : index
    %c0_1 = arith.constant 0 : index
    %0 = vector.load %arg1[%c0, %c0_0, %c0_1] : memref<1x4x256xf32, #tpu.memory_space<vmem>>, vector<1x4x256xf32>
    %1 = vector.shape_cast %0 : vector<1x4x256xf32> to vector<4x256xf32>
    %c0_2 = arith.constant 0 : index
    %c0_3 = arith.constant 0 : index
    %c0_4 = arith.constant 0 : index
    %2 = vector.load %arg4[%c0_2, %c0_3, %c0_4] : memref<1x12x256xf32, #tpu.memory_space<vmem>>, vector<1x4x256xf32>
    %3 = vector.shape_cast %2 : vector<1x4x256xf32> to vector<4x256xf32>
    %4 = vector.shape_cast %1 : vector<4x256xf32> to vector<1x4x256xf32>
    tpu.vector_store %arg4[%c0_2, %c0_3, %c0_4], %4 {strides = array<i32>} : memref<1x12x256xf32, #tpu.memory_space<vmem>>, vector<1x4x256xf32>,
    %cst = arith.constant 0.000000e+00 : f32
    %5 = vector.broadcast %cst : f32 to vector<4x290xf32>
    %c0_5 = arith.constant 0 : index
    %c0_6 = arith.constant 0 : index
    %6 = vector.load %arg5[%c0_5, %c0_6] : memref<4x290xf32, #tpu.memory_space<vmem>>, vector<4x290xf32>
    tpu.vector_store %arg5[%c0_5, %c0_6], %5 {strides = array<i32>} : memref<4x290xf32, #tpu.memory_space<vmem>>, vector<4x290xf32>,
    %c0_7 = arith.constant 0 : index
    %c17 = arith.constant 17 : index
    %7 = vector.load %arg5[%c0_7, %c17] : memref<4x290xf32, #tpu.memory_space<vmem>>, vector<4x256xf32>
    tpu.vector_store %arg5[%c0_7, %c17], %1 {strides = array<i32>} : memref<4x290xf32, #tpu.memory_space<vmem>>, vector<4x256xf32>,
    %8 = tpu.iota {dimensions = array<i32: 1>} : vector<1x256xi32>
    %c16_i32 = arith.constant 16 : i32
    %c0_i32 = arith.constant 0 : i32
    %9 = arith.cmpi eq, %c16_i32, %c0_i32 : i32
    %c1_i32 = arith.constant 1 : i32
    %10 = arith.select %9, %c1_i32, %c16_i32 : i32
    %11 = vector.broadcast %10 : i32 to vector<1x256xi32>
    %12 = arith.remsi %8, %11 : vector<1x256xi32>
    %c0_i32_8 = arith.constant 0 : i32
    %13 = vector.broadcast %c0_i32_8 : i32 to vector<1x256xi32>
    %14 = arith.cmpi ne, %12, %13 : vector<1x256xi32>
    %c0_i32_9 = arith.constant 0 : i32
    %15 = vector.broadcast %c0_i32_9 : i32 to vector<1x256xi32>
    %16 = arith.cmpi slt, %12, %15 : vector<1x256xi32>
    %c0_i32_10 = arith.constant 0 : i32
    %17 = arith.cmpi slt, %10, %c0_i32_10 : i32
    %18 = vector.broadcast %17 : i1 to vector<1x256xi1>
    %19 = vector.broadcast %18 : vector<1x256xi1> to vector<1x256xi1>
    %20 = arith.xori %16, %19 : vector<1x256xi1>
    %21 = arith.andi %20, %14 : vector<1x256xi1>
    %22 = vector.broadcast %10 : i32 to vector<1x256xi32>
    %23 = arith.addi %12, %22 : vector<1x256xi32>
    %24 = arith.select %21, %23, %12 : vector<1x256xi1>, vector<1x256xi32>
    %c0_11 = arith.constant 0 : index
    %c0_12 = arith.constant 0 : index
    %25 = vector.load %arg5[%c0_11, %c0_12] : memref<4x290xf32, #tpu.memory_space<vmem>>, vector<4x256xf32>
    %c1_i32_13 = arith.constant 1 : i32
    %26 = vector.broadcast %c1_i32_13 : i32 to vector<1x256xi32>
    %27 = arith.cmpi sge, %24, %26 : vector<1x256xi32>
    %cst_14 = arith.constant 0.000000e+00 : f32
    %28 = vector.shape_cast %27 : vector<1x256xi1> to vector<1x256xi1>
    %29 = vector.broadcast %28 : vector<1x256xi1> to vector<4x256xi1>
    %30 = vector.broadcast %cst_14 : f32 to vector<4x256xf32>
    %31 = arith.select %29, %25, %30 : vector<4x256xi1>, vector<4x256xf32>
    %c0_15 = arith.constant 0 : index
    %c0_16 = arith.constant 0 : index
    %32 = vector.load %arg6[%c0_15, %c0_16] : memref<36x256xf32, #tpu.memory_space<vmem>>, vector<4x256xf32>
    tpu.vector_store %arg6[%c0_15, %c0_16], %31 {strides = array<i32>} : memref<36x256xf32, #tpu.memory_space<vmem>>, vector<4x256xf32>,
    %c0_17 = arith.constant 0 : index
    %c1 = arith.constant 1 : index
    %33 = vector.load %arg5[%c0_17, %c1] : memref<4x290xf32, #tpu.memory_space<vmem>>, vector<4x256xf32>
    %c4 = arith.constant 4 : index
    %c0_18 = arith.constant 0 : index
    %34 = vector.load %arg6[%c4, %c0_18] : memref<36x256xf32, #tpu.memory_space<vmem>>, vector<4x256xf32>
    tpu.vector_store %arg6[%c4, %c0_18], %33 {strides = array<i32>} : memref<36x256xf32, #tpu.memory_space<vmem>>, vector<4x256xf32>,
    %c0_19 = arith.constant 0 : index
    %c2 = arith.constant 2 : index
    %35 = vector.load %arg5[%c0_19, %c2] : memref<4x290xf32, #tpu.memory_space<vmem>>, vector<4x256xf32>
    %c14_i32 = arith.constant 14 : i32
    %36 = vector.broadcast %c14_i32 : i32 to vector<1x256xi32>
    %37 = arith.cmpi sle, %24, %36 : vector<1x256xi32>
    %cst_20 = arith.constant 0.000000e+00 : f32
    %38 = vector.shape_cast %37 : vector<1x256xi1> to vector<1x256xi1>
    %39 = vector.broadcast %38 : vector<1x256xi1> to vector<4x256xi1>
    %40 = vector.broadcast %cst_20 : f32 to vector<4x256xf32>
    %41 = arith.select %39, %35, %40 : vector<4x256xi1>, vector<4x256xf32>
    %c8 = arith.constant 8 : index
    %c0_21 = arith.constant 0 : index
    %42 = vector.load %arg6[%c8, %c0_21] : memref<36x256xf32, #tpu.memory_space<vmem>>, vector<4x256xf32>
    tpu.vector_store %arg6[%c8, %c0_21], %41 {strides = array<i32>} : memref<36x256xf32, #tpu.memory_space<vmem>>, vector<4x256xf32>,
    %c0_22 = arith.constant 0 : index
    %c16 = arith.constant 16 : index
    %43 = vector.load %arg5[%c0_22, %c16] : memref<4x290xf32, #tpu.memory_space<vmem>>, vector<4x256xf32>
    %c1_i32_23 = arith.constant 1 : i32
    %44 = vector.broadcast %c1_i32_23 : i32 to vector<1x256xi32>
    %45 = arith.cmpi sge, %24, %44 : vector<1x256xi32>
    %cst_24 = arith.constant 0.000000e+00 : f32
    %46 = vector.shape_cast %45 : vector<1x256xi1> to vector<1x256xi1>
    %47 = vector.broadcast %46 : vector<1x256xi1> to vector<4x256xi1>
    %48 = vector.broadcast %cst_24 : f32 to vector<4x256xf32>
    %49 = arith.select %47, %43, %48 : vector<4x256xi1>, vector<4x256xf32>
    %c12 = arith.constant 12 : index
    %c0_25 = arith.constant 0 : index
    %50 = vector.load %arg6[%c12, %c0_25] : memref<36x256xf32, #tpu.memory_space<vmem>>, vector<4x256xf32>
    tpu.vector_store %arg6[%c12, %c0_25], %49 {strides = array<i32>} : memref<36x256xf32, #tpu.memory_space<vmem>>, vector<4x256xf32>,
    %c0_26 = arith.constant 0 : index
    %c17_27 = arith.constant 17 : index
    %51 = vector.load %arg5[%c0_26, %c17_27] : memref<4x290xf32, #tpu.memory_space<vmem>>, vector<4x256xf32>
    %c16_28 = arith.constant 16 : index
    %c0_29 = arith.constant 0 : index
    %52 = vector.load %arg6[%c16_28, %c0_29] : memref<36x256xf32, #tpu.memory_space<vmem>>, vector<4x256xf32>
    tpu.vector_store %arg6[%c16_28, %c0_29], %51 {strides = array<i32>} : memref<36x256xf32, #tpu.memory_space<vmem>>, vector<4x256xf32>,
    %c0_30 = arith.constant 0 : index
    %c18 = arith.constant 18 : index
    %53 = vector.load %arg5[%c0_30, %c18] : memref<4x290xf32, #tpu.memory_space<vmem>>, vector<4x256xf32>
    %c14_i32_31 = arith.constant 14 : i32
    %54 = vector.broadcast %c14_i32_31 : i32 to vector<1x256xi32>
    %55 = arith.cmpi sle, %24, %54 : vector<1x256xi32>
    %cst_32 = arith.constant 0.000000e+00 : f32
    %56 = vector.shape_cast %55 : vector<1x256xi1> to vector<1x256xi1>
    %57 = vector.broadcast %56 : vector<1x256xi1> to vector<4x256xi1>
    %58 = vector.broadcast %cst_32 : f32 to vector<4x256xf32>
    %59 = arith.select %57, %53, %58 : vector<4x256xi1>, vector<4x256xf32>
    %c20 = arith.constant 20 : index
    %c0_33 = arith.constant 0 : index
    %60 = vector.load %arg6[%c20, %c0_33] : memref<36x256xf32, #tpu.memory_space<vmem>>, vector<4x256xf32>
    tpu.vector_store %arg6[%c20, %c0_33], %59 {strides = array<i32>} : memref<36x256xf32, #tpu.memory_space<vmem>>, vector<4x256xf32>,
    %c0_34 = arith.constant 0 : index
    %c32 = arith.constant 32 : index
    %61 = vector.load %arg5[%c0_34, %c32] : memref<4x290xf32, #tpu.memory_space<vmem>>, vector<4x256xf32>
    %c1_i32_35 = arith.constant 1 : i32
    %62 = vector.broadcast %c1_i32_35 : i32 to vector<1x256xi32>
    %63 = arith.cmpi sge, %24, %62 : vector<1x256xi32>
    %cst_36 = arith.constant 0.000000e+00 : f32
    %64 = vector.shape_cast %63 : vector<1x256xi1> to vector<1x256xi1>
    %65 = vector.broadcast %64 : vector<1x256xi1> to vector<4x256xi1>
    %66 = vector.broadcast %cst_36 : f32 to vector<4x256xf32>
    %67 = arith.select %65, %61, %66 : vector<4x256xi1>, vector<4x256xf32>
    %c24 = arith.constant 24 : index
    %c0_37 = arith.constant 0 : index
    %68 = vector.load %arg6[%c24, %c0_37] : memref<36x256xf32, #tpu.memory_space<vmem>>, vector<4x256xf32>
    tpu.vector_store %arg6[%c24, %c0_37], %67 {strides = array<i32>} : memref<36x256xf32, #tpu.memory_space<vmem>>, vector<4x256xf32>,
    %c0_38 = arith.constant 0 : index
    %c33 = arith.constant 33 : index
    %69 = vector.load %arg5[%c0_38, %c33] : memref<4x290xf32, #tpu.memory_space<vmem>>, vector<4x256xf32>
    %c28 = arith.constant 28 : index
    %c0_39 = arith.constant 0 : index
    %70 = vector.load %arg6[%c28, %c0_39] : memref<36x256xf32, #tpu.memory_space<vmem>>, vector<4x256xf32>
    tpu.vector_store %arg6[%c28, %c0_39], %69 {strides = array<i32>} : memref<36x256xf32, #tpu.memory_space<vmem>>, vector<4x256xf32>,
    %c0_40 = arith.constant 0 : index
    %c34 = arith.constant 34 : index
    %71 = vector.load %arg5[%c0_40, %c34] : memref<4x290xf32, #tpu.memory_space<vmem>>, vector<4x256xf32>
    %c14_i32_41 = arith.constant 14 : i32
    %72 = vector.broadcast %c14_i32_41 : i32 to vector<1x256xi32>
    %73 = arith.cmpi sle, %24, %72 : vector<1x256xi32>
    %cst_42 = arith.constant 0.000000e+00 : f32
    %74 = vector.shape_cast %73 : vector<1x256xi1> to vector<1x256xi1>
    %75 = vector.broadcast %74 : vector<1x256xi1> to vector<4x256xi1>
    %76 = vector.broadcast %cst_42 : f32 to vector<4x256xf32>
    %77 = arith.select %75, %71, %76 : vector<4x256xi1>, vector<4x256xf32>
    %c32_43 = arith.constant 32 : index
    %c0_44 = arith.constant 0 : index
    %78 = vector.load %arg6[%c32_43, %c0_44] : memref<36x256xf32, #tpu.memory_space<vmem>>, vector<4x256xf32>
    tpu.vector_store %arg6[%c32_43, %c0_44], %77 {strides = array<i32>} : memref<36x256xf32, #tpu.memory_space<vmem>>, vector<4x256xf32>,
    %c0_45 = arith.constant 0 : index
    %c0_46 = arith.constant 0 : index
    %79 = vector.load %arg2[%c0_45, %c0_46] : memref<8x36xf32, #tpu.memory_space<vmem>>, vector<8x36xf32>
    %c0_47 = arith.constant 0 : index
    %c0_48 = arith.constant 0 : index
    %80 = vector.load %arg6[%c0_47, %c0_48] : memref<36x256xf32, #tpu.memory_space<vmem>>, vector<36x256xf32>
    %cst_49 = arith.constant dense<0.000000e+00> : vector<8x256xf32>
    %81 = tpu.matmul %79, %80, %cst_49 {dimension_numbers = #tpu.dot_dimension_numbers<[1], [0], [0], [1], [0, 0, 1, 1], [], []>} : vector<8x36xf32>, vector<36x256xf32>, vector<8x256xf32> -> vector<8x256xf32>
    %c0_50 = arith.constant 0 : index
    %c0_51 = arith.constant 0 : index
    %82 = vector.load %arg3[%c0_50, %c0_51] : memref<8x1xf32, #tpu.memory_space<vmem>>, vector<8x1xf32>
    %83 = vector.broadcast %82 : vector<8x1xf32> to vector<8x256xf32>
    %84 = arith.addf %81, %83 : vector<8x256xf32>
    %cst_52 = arith.constant 0.000000e+00 : f32
    %85 = vector.broadcast %cst_52 : f32 to vector<8x256xf32>
    %86 = arith.maximumf %84, %85 : vector<8x256xf32>
    %c0_53 = arith.constant 0 : index
    %c4_54 = arith.constant 4 : index
    %c0_55 = arith.constant 0 : index
    %87 = vector.load %arg4[%c0_53, %c4_54, %c0_55] : memref<1x12x256xf32, #tpu.memory_space<vmem>>, vector<1x8x256xf32>
    %88 = vector.shape_cast %87 : vector<1x8x256xf32> to vector<8x256xf32>
    %89 = vector.shape_cast %86 : vector<8x256xf32> to vector<1x8x256xf32>
    tpu.vector_store %arg4[%c0_53, %c4_54, %c0_55], %89 {strides = array<i32>} : memref<1x12x256xf32, #tpu.memory_space<vmem>>, vector<1x8x256xf32>,
    return
  }
  func.func @transform_0(%arg0: i32) -> (i32, i32, i32) {
    %c0_i32 = arith.constant 0 : i32
    %c0_i32_0 = arith.constant 0 : i32
    %c0_i32_1 = arith.constant 0 : i32
    return %arg0, %c0_i32, %c0_i32_0 : i32, i32, i32
  }
  func.func @transform_1(%arg0: i32) -> (i32, i32) {
    %c0_i32 = arith.constant 0 : i32
    %c0_i32_0 = arith.constant 0 : i32
    %c0_i32_1 = arith.constant 0 : i32
    return %c0_i32, %c0_i32_0 : i32, i32
  }
  func.func @transform_2(%arg0: i32) -> (i32, i32) {
    %c0_i32 = arith.constant 0 : i32
    %c0_i32_0 = arith.constant 0 : i32
    %c0_i32_1 = arith.constant 0 : i32
    return %c0_i32, %c0_i32_0 : i32, i32
  }
  func.func @transform_3(%arg0: i32) -> (i32, i32, i32) {
    %c0_i32 = arith.constant 0 : i32
    %c0_i32_0 = arith.constant 0 : i32
    %c0_i32_1 = arith.constant 0 : i32
    return %arg0, %c0_i32, %c0_i32_0 : i32, i32, i32
  }
}

</mosaic_0001>

<llo_original>
// kernel: dense_layer_forward.1
$region0: #{dense_layer_forward.1}
  #allocation0 [shape = 'u32[]', space=smem, size = 0x4, offset = 0x4, fixed_abs, tag = 'smem constant byte address 0x4 - core index']
  #allocation1 [shape = 'u32[72,128]{1,0:T(1,128)}', space=vmem, size = 0x9000, scoped, tag = 'internal scratch']
  #allocation2 [shape = 'f32[4,290]{1,0:T(4,128)}', space=vmem, size = 0x1800, scoped, tag = 'scratch operand']
  #allocation3 [shape = 'f32[36,256]{1,0:T(8,128)}', space=vmem, size = 0xa000, scoped, tag = 'scratch operand']
  %s0 = inlined_call_operand.vmem [shape: f32[2,4,256], index: 0, kind: input, shape index: {}]
  %s1 = inlined_call_operand.vmem [shape: f32[8,36], index: 1, kind: input, shape index: {}]
  %s2 = inlined_call_operand.vmem [shape: f32[8,1], index: 2, kind: input, shape index: {}]
  %s3 = inlined_call_operand.vmem [shape: f32[2,12,256], index: 3, kind: output, shape index: {}]
  %s4 = sld [smem:[#allocation0]]
  $region45: #{dense_layer_forward.1} parent=0
    _
  %s6 = ssub.s32 1, %s4
  %s7 = scalar_select 0, %s6, %s4
  loop: start=0, step=1, limit=4
  $region2: #{dense_layer_forward.1} parent=0 // loop_pre_header
    _
  $region3: #{dense_layer_forward.1} parent=0 // loop_header
    %s9 = sphi 0, %s13
    %p10 = scmp.ge.s32.totalorder %s9, 4
    %s19 = sphi 0, %s21
    %s22 = sphi 0, %s19
    %s23 = sphi 0, %s22
    %s39 = sphi 0, %s23
    %s43 = sphi 0, %s43
    %s45 = sphi 0, %s43
    %s46 = sphi 0, %s45
    %s60 = sphi 0, %s46
    %s64 = sphi 0, %s64
    %s66 = sphi 0, %s64
    %s67 = sphi 0, %s66
    %s81 = sphi 0, %s67
    %s87 = sphi 0, %s89
    %s90 = sphi 0, %s87
    %s91 = sphi 0, %s90
    %s107 = sphi 0, %s91
  $region4: #{dense_layer_forward.1} parent=0 // loop_header_branch
    %12 = sbr.rel (%p10) target = $region8
  $region5: #{dense_layer_forward.1} parent=0 // loop_body
    %s14 = ssub.s32 %s9, 1
    %s15 = ssub.s32 %s9, 2
    %s16 = sadd.s32 %s9, 1
    %s17 = ssub.s32 %s9, %s16
    %p18 = scmp.eq.s32.totalorder %s17, 0
    %s20 = sadd.s32 %s19, 1
    %s21 = scalar_select %p18, %s19, %s20
    %p24 = pneg %p18
    %p25 = scmp.eq.s32.totalorder %s9, 1
    %p26 = por %p24, %p25
    %p27 = scmp.ne.s32.totalorder %s19, %s22
    %p28 = scmp.eq.s32.totalorder %s9, 0
    %p29 = por %p27, %p28
    %p30 = scmp.ne.s32.totalorder %s19, %s22
    %p31 = scmp.eq.s32.totalorder %s14, 1
    %p32 = por %p30, %p31
    %p33 = scmp.ne.s32.totalorder %s22, %s23
    %p34 = scmp.eq.s32.totalorder %s14, 0
    %p35 = por %p33, %p34
    %p36 = scmp.ne.s32.totalorder %s22, %s23
    %p37 = scmp.eq.s32.totalorder %s15, 1
    %p38 = por %p36, %p37
    %p40 = scmp.ne.s32.totalorder %s23, %s39
    %p41 = scmp.eq.s32.totalorder %s15, 0
    %p42 = por %p40, %p41
    %s44 = sadd.s32 %s43, 1
    %p47 = scmp.eq.s32.totalorder %s9, 1
    %p48 = scmp.ne.s32.totalorder %s43, %s45
    %p49 = scmp.eq.s32.totalorder %s9, 0
    %p50 = por %p48, %p49
    %p51 = scmp.ne.s32.totalorder %s43, %s45
    %p52 = scmp.eq.s32.totalorder %s14, 1
    %p53 = por %p51, %p52
    %p54 = scmp.ne.s32.totalorder %s45, %s46
    %p55 = scmp.eq.s32.totalorder %s14, 0
    %p56 = por %p54, %p55
    %p57 = scmp.ne.s32.totalorder %s45, %s46
    %p58 = scmp.eq.s32.totalorder %s15, 1
    %p59 = por %p57, %p58
    %p61 = scmp.ne.s32.totalorder %s46, %s60
    %p62 = scmp.eq.s32.totalorder %s15, 0
    %p63 = por %p61, %p62
    %s65 = sadd.s32 %s64, 1
    %p68 = scmp.eq.s32.totalorder %s9, 1
    %p69 = scmp.ne.s32.totalorder %s64, %s66
    %p70 = scmp.eq.s32.totalorder %s9, 0
    %p71 = por %p69, %p70
    %p72 = scmp.ne.s32.totalorder %s64, %s66
    %p73 = scmp.eq.s32.totalorder %s14, 1
    %p74 = por %p72, %p73
    %p75 = scmp.ne.s32.totalorder %s66, %s67
    %p76 = scmp.eq.s32.totalorder %s14, 0
    %p77 = por %p75, %p76
    %p78 = scmp.ne.s32.totalorder %s66, %s67
    %p79 = scmp.eq.s32.totalorder %s15, 1
    %p80 = por %p78, %p79
    %p82 = scmp.ne.s32.totalorder %s67, %s81
    %p83 = scmp.eq.s32.totalorder %s15, 0
    %p84 = por %p82, %p83
    %s85 = ssub.s32 %s9, %s16
    %p86 = scmp.eq.s32.totalorder %s85, 0
    %s88 = sadd.s32 %s87, 1
    %s89 = scalar_select %p86, %s87, %s88
    %p92 = pneg %p86
    %p93 = scmp.eq.s32.totalorder %s9, 1
    %p94 = por %p92, %p93
    %p95 = scmp.ne.s32.totalorder %s87, %s90
    %p96 = scmp.eq.s32.totalorder %s9, 0
    %p97 = por %p95, %p96
    %p98 = scmp.ne.s32.totalorder %s87, %s90
    %p99 = scmp.eq.s32.totalorder %s14, 1
    %p100 = por %p98, %p99
    %p101 = scmp.ne.s32.totalorder %s90, %s91
    %p102 = scmp.eq.s32.totalorder %s14, 0
    %p103 = por %p101, %p102
    %p104 = scmp.ne.s32.totalorder %s90, %s91
    %p105 = scmp.eq.s32.totalorder %s15, 1
    %p106 = por %p104, %p105
    %p108 = scmp.ne.s32.totalorder %s91, %s107
    %p109 = scmp.eq.s32.totalorder %s15, 0
    %p110 = por %p108, %p109
    %p111 = scmp.le.s32.totalorder 1, %s9
    %p112 = scmp.lt.s32.totalorder %s9, 3
    %p113 = pnand %p111, %p112
    %p114 = pneg %p113
    // Predicated region
    $region9: #{dense_layer_forward.1} parent=5 // pred_check
      _
    $region10: #{dense_layer_forward.1} parent=5 // pred_check_branch
      %116 = sbr.rel (%p113) target = $region12
    $region11: #{dense_layer_forward.1} parent=5 // pred_region
      %s117 = ssub.s32 %s9, 1
      // Predicated region
      $region13: #{dense_layer_forward.1} parent=11 // pred_check
        %p118 = pneg %p56
      $region14: #{dense_layer_forward.1} parent=11 // pred_check_branch
        %120 = sbr.rel (%p118) target = $region16
      $region15: #{dense_layer_forward.1} parent=11 // pred_region
        _
      $region16: #{dense_layer_forward.1} parent=11 // pred_fallthru
        _
      // Predicated region
      $region17: #{dense_layer_forward.1} parent=11 // pred_check
        %p121 = pneg %p77
      $region18: #{dense_layer_forward.1} parent=11 // pred_check_branch
        %123 = sbr.rel (%p121) target = $region20
      $region19: #{dense_layer_forward.1} parent=11 // pred_region
        _
      $region20: #{dense_layer_forward.1} parent=11 // pred_fallthru
        _
    $region12: #{dense_layer_forward.1} parent=5 // pred_fallthru
      _
    %p124 = scmp.lt.s32.totalorder %s9, 2
    // Predicated region
    $region21: #{dense_layer_forward.1} parent=5 // pred_check
      %p125 = pneg %p124
    $region22: #{dense_layer_forward.1} parent=5 // pred_check_branch
      %127 = sbr.rel (%p125) target = $region24
    $region23: #{dense_layer_forward.1} parent=5 // pred_region
      // Predicated region
      $region25: #{dense_layer_forward.1} parent=23 // pred_check
        %p128 = pneg %p29
      $region26: #{dense_layer_forward.1} parent=23 // pred_check_branch
        %130 = sbr.rel (%p128) target = $region28
      $region27: #{dense_layer_forward.1} parent=23 // pred_region
        %p131 = scmp.lt.s32.totalorder %s9, 1
        %s132 = scalar_select %p131, %s9, 1
        %s133 = smul.addr %s132, 2
        %s134 = smul.addr %s133, 4
        %s135 = scalar_lea.vmem %s0, %s134
      $region28: #{dense_layer_forward.1} parent=23 // pred_fallthru
        _
    $region24: #{dense_layer_forward.1} parent=5 // pred_fallthru
      _
    %p136 = scmp.le.s32.totalorder 1, %s9
    %p137 = scmp.lt.s32.totalorder %s9, 3
    %p138 = pnand %p136, %p137
    %p139 = pneg %p138
    // Predicated region
    $region29: #{dense_layer_forward.1} parent=5 // pred_check
      _
    $region30: #{dense_layer_forward.1} parent=5 // pred_check_branch
      %141 = sbr.rel (%p138) target = $region32
    $region31: #{dense_layer_forward.1} parent=5 // pred_region
      %s142 = ssub.s32 %s9, 1
      %p143 = scmp.lt.s32.totalorder %s14, 1
      %s144 = scalar_select %p143, %s14, 1
      %s145 = smul.addr %s144, 2
      %s146 = smul.addr %s145, 4
      %s147 = scalar_lea.vmem %s0, %s146
      %p148 = pneg %p35
      %p149 = pneg %p32
      %p150 = pneg %p56
      %p151 = pneg %p53
      %p152 = pneg %p77
      %p153 = pneg %p74
      %p154 = pneg %p103
      %p155 = pneg %p100
      %p156 = scmp.lt.s32.totalorder %s14, 1
      %s157 = scalar_select %p156, %s14, 1
      %s158 = smul.addr %s157, 4
      %s159 = smul.addr %s158, 8
      %s160 = scalar_lea.vmem %s3, %s159
      %p161 = scmp.lt.s32.totalorder %s14, 1
      %s162 = scalar_select %p161, %s14, 1
      %s163 = smul.addr %s162, 2
      %s164 = smul.addr %s163, 4
      %s165 = scalar_lea.vmem %s0, %s164
      %p166 = scmp.lt.s32.totalorder %s14, 1
      %s167 = scalar_select %p166, %s14, 1
      %s168 = smul.addr %s167, 4
      %s169 = smul.addr %s168, 8
      %s170 = scalar_lea.vmem %s3, %s169
      %v171 = vld [vmem:[%s165] sm:$0xff]
      %173 = vst [vmem:[#allocation1] ss:$2 sm:$0xff] %v171
      %v174 = vld.sshfl [vmem:[#allocation1] sm:$0xff pattern:$0x75316420]
      %v175 = vld.sshfl [vmem:[#allocation1 + $0x8] sm:$0xff pattern:$0x75316420]
      %178 = vst [vmem:[%s170] sm:$0xf] %v174
      %179 = vst [vmem:[%s170 + $0x8] sm:$0xf] %v175
      %180 = vst [vmem:[#allocation2] sm:$0xff] 0.0
      %vm181 = vcmask 273408
      %182 = vst.msk [vmem:[#allocation2 + $0x8] sm:$0xf] %vm181, 0.0
      %183 = vrot.lane.b32.xlu0 %v171, 17
      %v184 = vpop.permute.xlu0 %183
      %v185 = vrot.slane %v184, 4
      %vm186 = vcmask 138240
      %v187 = vsel %vm186, %v185, %v184
      %vm190 = vcmask 1043592
      %vm191 = vcmask 1047556
      %vm192 = vmor %vm191, %vm190
      %193 = vst.msk [vmem:[#allocation2] sm:$0xff] %vm192, %v187
      %vm194 = vcmask 134144
      %195 = vst.msk [vmem:[#allocation2 + $0x8] sm:$0xf] %vm194, %v185
      %v196 = vlaneseq
      %v197 = vand.u32 %v196, 127
      %v198 = vadd.s32 %v197, 128
      %vm199 = vcmp.lt.s32.totalorder %v197, 0
      %v200 = vsub.s32 0, %v197
      %v201 = vsel %vm199, %v200, %v197
      %v202 = vshrl.u32 %v201, 4
      %v203 = vand.u32 %v201, 15
      %v204 = vsub.s32 0, %v203
      %v205 = vsel %vm199, %v204, %v203
      %vm206 = vcmp.lt.s32.totalorder %v198, 0
      %v207 = vsub.s32 0, %v198
      %v208 = vsel %vm206, %v207, %v198
      %v209 = vshrl.u32 %v208, 4
      %v210 = vand.u32 %v208, 15
      %v211 = vsub.s32 0, %v210
      %v212 = vsel %vm206, %v211, %v210
      %vm213 = vcmp.ne.s32.totalorder %v205, 0
      %vm214 = vcmp.ne.s32.totalorder %v212, 0
      %vm215 = vcmp.lt.s32.totalorder %v205, 0
      %vm216 = vcmp.lt.s32.totalorder %v212, 0
      %vm217 = vmand %vm215, %vm213
      %vm218 = vmand %vm216, %vm214
      %v219 = vadd.s32 %v205, 16
      %v220 = vadd.s32 %v212, 16
      %v221 = vsel %vm217, %v219, %v205
      %v222 = vsel %vm218, %v220, %v212
      %v223 = vld [vmem:[#allocation2] sm:$0xff]
      %vm224 = vcmp.ge.s32.totalorder %v221, 1
      %vm225 = vcmp.ge.s32.totalorder %v222, 1
      %v226 = vsel %vm224, 1, 0
      %v227 = vsel %vm225, 1, 0
      %vm228 = vcmp.eq.s32.totalorder %v226, 1
      %vm229 = vcmp.eq.s32.totalorder %v227, 1
      %231 = vst [vmem:[#allocation1] ss:$2 sm:$0xff] %v223
      %v232 = vld.sshfl [vmem:[#allocation1] sm:$0xff pattern:$0x75316420]
      %v233 = vld.sshfl [vmem:[#allocation1 + $0x8] sm:$0xff pattern:$0x75316420]
      %v236 = vsel %vm228, %v232, 0.0
      %v237 = vsel %vm229, %v233, 0.0
      %238 = vst [vmem:[#allocation3] sm:$0xf] %v236
      %239 = vst [vmem:[#allocation3 + $0x8] sm:$0xf] %v237
      %v240 = vld [vmem:[#allocation2] sm:$0xff]
      %v241 = vld [vmem:[#allocation2 + $0x8] sm:$0xf]
      %s244 = scalar_lea.vmem [#allocation1], 1
      %245 = vst [vmem:[%s244] ss:$2 sm:$0xff] %v240
      %s246 = scalar_lea.vmem [#allocation1], 17
      %247 = vst [vmem:[%s246] ss:$2 sm:$0xff] %v241
      %v248 = vld.sshfl [vmem:[#allocation1] sm:$0xff pattern:$0x75316420]
      %v249 = vld.sshfl [vmem:[#allocation1 + $0x8] sm:$0xff pattern:$0x75316420]
      %v250 = vld.sshfl [vmem:[#allocation1 + $0x10] sm:$0xff pattern:$0x75316420]
      %251 = vrot.lane.b32.xlu0 %v248, 127
      %v252 = vpop.permute.xlu0 %251
      %253 = vrot.lane.b32.xlu0 %v249, 127
      %v254 = vpop.permute.xlu0 %253
      %255 = vrot.lane.b32.xlu0 %v250, 127
      %v256 = vpop.permute.xlu0 %255
      %vm257 = vcmask 1039360
      %v258 = vsel %vm257, %v252, %v254
      %v259 = vsel %vm257, %v254, %v256
      %262 = vst [vmem:[#allocation3] sm:$0xf0] %v258
      %263 = vst [vmem:[#allocation3 + $0x8] sm:$0xf0] %v259
      %v264 = vld [vmem:[#allocation2] sm:$0xff]
      %v265 = vld [vmem:[#allocation2 + $0x8] sm:$0xf]
      %vm266 = vcmp.le.s32.totalorder %v221, 14
      %vm267 = vcmp.le.s32.totalorder %v222, 14
      %v268 = vsel %vm266, 1, 0
      %v269 = vsel %vm267, 1, 0
      %vm270 = vcmp.eq.s32.totalorder %v268, 1
      %vm271 = vcmp.eq.s32.totalorder %v269, 1
      %274 = vst [vmem:[#allocation1] ss:$2 sm:$0xff] %v264
      %s275 = scalar_lea.vmem [#allocation1], 16
      %276 = vst [vmem:[%s275] ss:$2 sm:$0xff] %v265
      %v277 = vld.sshfl [vmem:[#allocation1] sm:$0xff pattern:$0x75316420]
      %v278 = vld.sshfl [vmem:[#allocation1 + $0x8] sm:$0xff pattern:$0x75316420]
      %v279 = vld.sshfl [vmem:[#allocation1 + $0x10] sm:$0xff pattern:$0x75316420]
      %280 = vrot.lane.b32.xlu0 %v277, 126
      %v281 = vpop.permute.xlu0 %280
      %282 = vrot.lane.b32.xlu0 %v278, 126
      %v283 = vpop.permute.xlu0 %282
      %284 = vrot.lane.b32.xlu0 %v279, 126
      %v285 = vpop.permute.xlu0 %284
      %vm286 = vcmask 1031168
      %v287 = vsel %vm286, %v281, %v283
      %v288 = vsel %vm286, %v283, %v285
      %v291 = vsel %vm270, %v287, 0.0
      %v292 = vsel %vm271, %v288, 0.0
      %293 = vst [vmem:[#allocation3 + $0x10] sm:$0xf] %v291
      %294 = vst [vmem:[#allocation3 + $0x18] sm:$0xf] %v292
      %v295 = vld [vmem:[#allocation2] sm:$0xff]
      %v296 = vld [vmem:[#allocation2 + $0x8] sm:$0xf]
      %299 = vst [vmem:[#allocation1] ss:$2 sm:$0xff] %v295
      %s300 = scalar_lea.vmem [#allocation1], 16
      %301 = vst [vmem:[%s300] ss:$2 sm:$0xff] %v296
      %v302 = vld.sshfl [vmem:[#allocation1] sm:$0xff pattern:$0x75316420]
      %v303 = vld.sshfl [vmem:[#allocation1 + $0x8] sm:$0xff pattern:$0x75316420]
      %v304 = vld.sshfl [vmem:[#allocation1 + $0x10] sm:$0xff pattern:$0x75316420]
      %305 = vrot.lane.b32.xlu0 %v302, 112
      %v306 = vpop.permute.xlu0 %305
      %307 = vrot.lane.b32.xlu0 %v303, 112
      %v308 = vpop.permute.xlu0 %307
      %309 = vrot.lane.b32.xlu0 %v304, 112
      %v310 = vpop.permute.xlu0 %309
      %vm311 = vcmask 916480
      %v312 = vsel %vm311, %v306, %v308
      %v313 = vsel %vm311, %v308, %v310
      %v316 = vsel %vm228, %v312, 0.0
      %v317 = vsel %vm229, %v313, 0.0
      %v320 = vrot.slane %v316, 4
      %v321 = vrot.slane %v317, 4
      %324 = vst [vmem:[#allocation3 + $0x10] sm:$0xf0] %v320
      %325 = vst [vmem:[#allocation3 + $0x18] sm:$0xf0] %v321
      %v326 = vld [vmem:[#allocation2] sm:$0xff]
      %v327 = vld [vmem:[#allocation2 + $0x8] sm:$0xf]
      %330 = vst [vmem:[#allocation1] ss:$2 sm:$0xff] %v326
      %s331 = scalar_lea.vmem [#allocation1], 16
      %332 = vst [vmem:[%s331] ss:$2 sm:$0xff] %v327
      %v333 = vld.sshfl [vmem:[#allocation1] sm:$0xff pattern:$0x75316420]
      %v334 = vld.sshfl [vmem:[#allocation1 + $0x8] sm:$0xff pattern:$0x75316420]
      %v335 = vld.sshfl [vmem:[#allocation1 + $0x10] sm:$0xff pattern:$0x75316420]
      %336 = vrot.lane.b32.xlu0 %v333, 111
      %v337 = vpop.permute.xlu0 %336
      %338 = vrot.lane.b32.xlu0 %v334, 111
      %v339 = vpop.permute.xlu0 %338
      %340 = vrot.lane.b32.xlu0 %v335, 111
      %v341 = vpop.permute.xlu0 %340
      %vm342 = vcmask 908288
      %v343 = vsel %vm342, %v337, %v339
      %v344 = vsel %vm342, %v339, %v341
      %347 = vst [vmem:[#allocation3 + $0x20] sm:$0xf] %v343
      %348 = vst [vmem:[#allocation3 + $0x28] sm:$0xf] %v344
      %v349 = vld [vmem:[#allocation2] sm:$0xff]
      %v350 = vld [vmem:[#allocation2 + $0x8] sm:$0xf]
      %353 = vst [vmem:[#allocation1] ss:$2 sm:$0xff] %v349
      %s354 = scalar_lea.vmem [#allocation1], 16
      %355 = vst [vmem:[%s354] ss:$2 sm:$0xff] %v350
      %v356 = vld.sshfl [vmem:[#allocation1] sm:$0xff pattern:$0x75316420]
      %v357 = vld.sshfl [vmem:[#allocation1 + $0x8] sm:$0xff pattern:$0x75316420]
      %v358 = vld.sshfl [vmem:[#allocation1 + $0x10] sm:$0xff pattern:$0x75316420]
      %359 = vrot.lane.b32.xlu0 %v356, 110
      %v360 = vpop.permute.xlu0 %359
      %361 = vrot.lane.b32.xlu0 %v357, 110
      %v362 = vpop.permute.xlu0 %361
      %363 = vrot.lane.b32.xlu0 %v358, 110
      %v364 = vpop.permute.xlu0 %363
      %vm365 = vcmask 900096
      %v366 = vsel %vm365, %v360, %v362
      %v367 = vsel %vm365, %v362, %v364
      %v370 = vsel %vm270, %v366, 0.0
      %v371 = vsel %vm271, %v367, 0.0
      %v374 = vrot.slane %v370, 4
      %v375 = vrot.slane %v371, 4
      %378 = vst [vmem:[#allocation3 + $0x20] sm:$0xf0] %v374
      %379 = vst [vmem:[#allocation3 + $0x28] sm:$0xf0] %v375
      %v380 = vld [vmem:[#allocation2] sm:$0xff]
      %v381 = vld [vmem:[#allocation2 + $0x8] sm:$0xf]
      %384 = vst [vmem:[#allocation1] ss:$2 sm:$0xff] %v380
      %s385 = scalar_lea.vmem [#allocation1], 16
      %386 = vst [vmem:[%s385] ss:$2 sm:$0xff] %v381
      %v387 = vld.sshfl [vmem:[#allocation1] sm:$0xff pattern:$0x75316420]
      %v388 = vld.sshfl [vmem:[#allocation1 + $0x8] sm:$0xff pattern:$0x75316420]
      %v389 = vld.sshfl [vmem:[#allocation1 + $0x10] sm:$0xff pattern:$0x75316420]
      %390 = vrot.lane.b32.xlu0 %v387, 96
      %v391 = vpop.permute.xlu0 %390
      %392 = vrot.lane.b32.xlu0 %v388, 96
      %v393 = vpop.permute.xlu0 %392
      %394 = vrot.lane.b32.xlu0 %v389, 96
      %v395 = vpop.permute.xlu0 %394
      %vm396 = vcmask 785408
      %v397 = vsel %vm396, %v391, %v393
      %v398 = vsel %vm396, %v393, %v395
      %v401 = vsel %vm228, %v397, 0.0
      %v402 = vsel %vm229, %v398, 0.0
      %403 = vst [vmem:[#allocation3 + $0x30] sm:$0xf] %v401
      %404 = vst [vmem:[#allocation3 + $0x38] sm:$0xf] %v402
      %v405 = vld [vmem:[#allocation2] sm:$0xff]
      %v406 = vld [vmem:[#allocation2 + $0x8] sm:$0xf]
      %s409 = scalar_lea.vmem [#allocation1], 1
      %410 = vst [vmem:[%s409] ss:$2 sm:$0xff] %v405
      %s411 = scalar_lea.vmem [#allocation1], 17
      %412 = vst [vmem:[%s411] ss:$2 sm:$0xff] %v406
      %v413 = vld.sshfl [vmem:[#allocation1] sm:$0xff pattern:$0x75316420]
      %v414 = vld.sshfl [vmem:[#allocation1 + $0x8] sm:$0xff pattern:$0x75316420]
      %v415 = vld.sshfl [vmem:[#allocation1 + $0x10] sm:$0xff pattern:$0x75316420]
      %416 = vrot.lane.b32.xlu0 %v413, 95
      %v417 = vpop.permute.xlu0 %416
      %418 = vrot.lane.b32.xlu0 %v414, 95
      %v419 = vpop.permute.xlu0 %418
      %420 = vrot.lane.b32.xlu0 %v415, 95
      %v421 = vpop.permute.xlu0 %420
      %vm422 = vcmask 777216
      %v423 = vsel %vm422, %v417, %v419
      %v424 = vsel %vm422, %v419, %v421
      %427 = vst [vmem:[#allocation3 + $0x30] sm:$0xf0] %v423
      %428 = vst [vmem:[#allocation3 + $0x38] sm:$0xf0] %v424
      %v429 = vld [vmem:[#allocation2] sm:$0xff]
      %v430 = vld [vmem:[#allocation2 + $0x8] sm:$0xf]
      %433 = vst [vmem:[#allocation1] ss:$2 sm:$0xff] %v429
      %s434 = scalar_lea.vmem [#allocation1], 16
      %435 = vst [vmem:[%s434] ss:$2 sm:$0xff] %v430
      %v436 = vld.sshfl [vmem:[#allocation1] sm:$0xff pattern:$0x75316420]
      %v437 = vld.sshfl [vmem:[#allocation1 + $0x8] sm:$0xff pattern:$0x75316420]
      %v438 = vld.sshfl [vmem:[#allocation1 + $0x10] sm:$0xff pattern:$0x75316420]
      %439 = vrot.lane.b32.xlu0 %v436, 94
      %v440 = vpop.permute.xlu0 %439
      %441 = vrot.lane.b32.xlu0 %v437, 94
      %v442 = vpop.permute.xlu0 %441
      %443 = vrot.lane.b32.xlu0 %v438, 94
      %v444 = vpop.permute.xlu0 %443
      %vm445 = vcmask 769024
      %v446 = vsel %vm445, %v440, %v442
      %v447 = vsel %vm445, %v442, %v444
      %v450 = vsel %vm270, %v446, 0.0
      %v451 = vsel %vm271, %v447, 0.0
      %452 = vst [vmem:[#allocation3 + $0x40] sm:$0xf] %v450
      %453 = vst [vmem:[#allocation3 + $0x48] sm:$0xf] %v451
      %v454 = vld [vmem:[%s1] sm:$0xff]
      %v455 = vld [vmem:[#allocation3] sm:$0xff]
      %v456 = vld [vmem:[#allocation3 + $0x8] sm:$0xff]
      %v457 = vld [vmem:[#allocation3 + $0x10] sm:$0xff]
      %v458 = vld [vmem:[#allocation3 + $0x18] sm:$0xff]
      %v459 = vld [vmem:[#allocation3 + $0x20] sm:$0xff]
      %v460 = vld [vmem:[#allocation3 + $0x28] sm:$0xff]
      %v461 = vld [vmem:[#allocation3 + $0x30] sm:$0xff]
      %v462 = vld [vmem:[#allocation3 + $0x38] sm:$0xff]
      %v463 = vld [vmem:[#allocation3 + $0x40] sm:$0xf]
      %v464 = vld [vmem:[#allocation3 + $0x48] sm:$0xf]
      %v465 = vld [vmem:[%s2] sm:$0xff]
      %467 = vset.pattern.permute.xlu0 0
      %468 = vperm.xlu0 %467, %v465
      %v469 = vpop.permute.xlu0 %468
      %vm471 = vcmask 293888
      %v473 = vsel %vm471, %v454, 0
      %vm475 = vcmask 1043456
      %v477 = vsel %vm475, %v463, 0
      %v480 = vsel %vm475, %v464, 0
      %482 = vmatpush.msra.mxu0 0.0
      %483 = vmatpush.msra.mxu0 0.0
      %484 = vmatpush.msra.mxu0 0.0
      %485 = vmatpush.msra.mxu0 0.0
      %486 = vmatpush.msra.mxu0 0.0
      %487 = vmatpush.msra.mxu0 0.0
      %488 = vmatpush.msra.mxu0 0.0
      %489 = vmatpush.msra.mxu0 0.0
      %490 = vmatpush.msra.mxu0 0.0
      %491 = vmatpush.msra.mxu0 0.0
      %492 = vmatpush.msra.mxu0 0.0
      %493 = vmatpush.msra.mxu0 %v477
      %494 = vmatpush.msra.mxu0 %v461
      %495 = vmatpush.msra.mxu0 %v459
      %496 = vmatpush.msra.mxu0 %v457
      %497 = vmatpush.msra.mxu0 %v455
      %498 = vmatmul.f32.gmra.mxu0 %v473
      %v499 = vpop.f32.mrf.mxu0
      %v500 = vadd.f32 %v469, %v499
      %501 = vdwg.mxu0
      %502 = vmatpush.msra.mxu0 0.0
      %503 = vmatpush.msra.mxu0 0.0
      %504 = vmatpush.msra.mxu0 0.0
      %505 = vmatpush.msra.mxu0 0.0
      %506 = vmatpush.msra.mxu0 0.0
      %507 = vmatpush.msra.mxu0 0.0
      %508 = vmatpush.msra.mxu0 0.0
      %509 = vmatpush.msra.mxu0 0.0
      %510 = vmatpush.msra.mxu0 0.0
      %511 = vmatpush.msra.mxu0 0.0
      %512 = vmatpush.msra.mxu0 0.0
      %513 = vmatpush.msra.mxu0 %v480
      %514 = vmatpush.msra.mxu0 %v462
      %515 = vmatpush.msra.mxu0 %v460
      %516 = vmatpush.msra.mxu0 %v458
      %517 = vmatpush.msra.mxu0 %v456
      %518 = vmatmul.f32.gmra.mxu0 %v473
      %v519 = vpop.f32.mrf.mxu0
      %v520 = vadd.f32 %v469, %v519
      %521 = vdwg.mxu0
      %v522 = vmax.f32 %v500, 0.0
      %v523 = vmax.f32 %v520, 0.0
      %v526 = vrot.slane %v522, 4
      %v527 = vrot.slane %v523, 4
      %530 = vst [vmem:[%s170] sm:$0xf0] %v526
      %531 = vst [vmem:[%s170 + $0x8] sm:$0xf0] %v527
      %532 = vst [vmem:[%s170 + $0x10] sm:$0xf] %v526
      %533 = vst [vmem:[%s170 + $0x18] sm:$0xf] %v527
      %p534 = scmp.lt.s32.totalorder %s14, 1
      %s535 = scalar_select %p534, %s14, 1
      %s536 = smul.addr %s535, 4
      %s537 = smul.addr %s536, 8
      %s538 = scalar_lea.vmem %s3, %s537
      // Predicated region
      $region33: #{dense_layer_forward.1} parent=31 // pred_check
        %p539 = pneg %p100
      $region34: #{dense_layer_forward.1} parent=31 // pred_check_branch
        %541 = sbr.rel (%p539) target = $region36
      $region35: #{dense_layer_forward.1} parent=31 // pred_region
        _
      $region36: #{dense_layer_forward.1} parent=31 // pred_fallthru
        _
    $region32: #{dense_layer_forward.1} parent=5 // pred_fallthru
      _
    %p542 = scmp.le.s32.totalorder 2, %s9
    // Predicated region
    $region37: #{dense_layer_forward.1} parent=5 // pred_check
      %p543 = pneg %p542
    $region38: #{dense_layer_forward.1} parent=5 // pred_check_branch
      %545 = sbr.rel (%p543) target = $region40
    $region39: #{dense_layer_forward.1} parent=5 // pred_region
      %s546 = ssub.s32 %s9, 2
      // Predicated region
      $region41: #{dense_layer_forward.1} parent=39 // pred_check
        %p547 = pneg %p106
      $region42: #{dense_layer_forward.1} parent=39 // pred_check_branch
        %549 = sbr.rel (%p547) target = $region44
      $region43: #{dense_layer_forward.1} parent=39 // pred_region
        %p550 = scmp.lt.s32.totalorder %s15, 1
        %s551 = scalar_select %p550, %s15, 1
        %s552 = smul.addr %s551, 4
        %s553 = smul.addr %s552, 8
        %s554 = scalar_lea.vmem %s3, %s553
      $region44: #{dense_layer_forward.1} parent=39 // pred_fallthru
        _
    $region40: #{dense_layer_forward.1} parent=5 // pred_fallthru
      _
  $region6: #{dense_layer_forward.1} parent=0 // loop_footer
    %s13 = sadd.s32 1, %s9
  $region7: #{dense_layer_forward.1} parent=0 // loop_footer_branch
    %8 = sbr.rel target = $region3
  $region8: #{dense_layer_forward.1} parent=0 // loop_exit
    _

</llo_original>
